<compile_context>
chip_gen: v7x
topology: tpu7x:2x2x1
jax: 0.10.0
libtpu: 0.0.40
codegen_flags: <defaults>
</compile_context>

<pallas_src>
import functools
import math

import jax
import jax.numpy as jnp
from jax.experimental import pallas as pl
from jax.experimental.pallas import tpu as pltpu

# ----------------------------- config ---------------------------------------
B = 2            # batch
T = 8            # sequence length (block_size)
N_EMBD = 32      # n_embd
N_HEAD = 4       # n_head
HEAD_DIM = N_EMBD // N_HEAD
BIAS = True
DROPOUT = 0.0    # TODO(synk): dropout > 0 (training mode) not implemented; eval semantics only.

MXU_DTYPE = jnp.bfloat16     # MXU operand dtype (f32 accumulation)
MASK_VALUE = -1e30           # finite large-negative causal mask (robust vs. -inf in low precision)


# ----------------------------- kernel ---------------------------------------
def _fused_csa_kernel(x_ref, wqkv_ref, bqkv_ref, wo_ref, bo_ref, o_ref, *, n_head):
    """One batch element per grid step: c_attn -> causal MHA -> c_proj, all in VMEM."""
    f32 = jnp.float32
    t, c = x_ref.shape[1], x_ref.shape[2]
    d = c // n_head
    scale = 1.0 / math.sqrt(d)

    # ---- c_attn : (T, C) @ (C, 3C) + b   (bf16 MXU operands, f32 accumulate) ----
    x16 = x_ref[0].astype(MXU_DTYPE)
    w_qkv = wqkv_ref[...].astype(MXU_DTYPE)
    qkv = jnp.dot(x16, w_qkv, preferred_element_type=f32) + bqkv_ref[...]      # (T, 3C) f32

    # Causal mask, shared by all heads (built once from iotas, no buffer input needed).
    row = jax.lax.broadcasted_iota(jnp.int32, (t, t), 0)
    col = jax.lax.broadcasted_iota(jnp.int32, (t, t), 1)
    causal = col <= row

    # ---- per-head causal attention; head merge folded into the c_proj contraction ----
    #   concat_h(y_h) @ Wp + b  ==  sum_h y_h @ Wp[h*D:(h+1)*D, :] + b
    # TODO(synk): at production sizes (T >= 1024, C = 768+) batch the heads into a single
    # einsum ('hqd,hkd->hqk') and switch to flash-style kv tiling with an online softmax
    # instead of materializing the full (T, T) scores.
    acc = jnp.zeros((t, c), f32)
    for h in range(n_head):                                       # static unroll (n_head small)
        lo = h * d
        q = (qkv[:, lo:lo + d] * scale).astype(MXU_DTYPE)          # pre-scale q (T*D, not T*T)
        k = qkv[:, c + lo:c + lo + d].astype(MXU_DTYPE)
        v = qkv[:, 2 * c + lo:2 * c + lo + d].astype(MXU_DTYPE)

        # q @ k^T by contracting the last dims directly (no explicit transpose).
        s = jax.lax.dot_general(q, k, (((1,), (1,)), ((), ())),
                                preferred_element_type=f32)        # (T, T) f32
        s = jnp.where(causal, s, MASK_VALUE)
        s = s - jnp.max(s, axis=-1, keepdims=True)
        p = jnp.exp(s)
        # EUP reciprocal + multiply instead of a VPU divide.
        p = p * pl.reciprocal(jnp.sum(p, axis=-1, keepdims=True), approx=True)

        y_h = jnp.dot(p.astype(MXU_DTYPE), v, preferred_element_type=f32)       # (T, D)
        w_p_h = wo_ref[lo:lo + d, :].astype(MXU_DTYPE)                           # (D, C)
        acc = acc + jnp.dot(y_h.astype(MXU_DTYPE), w_p_h, preferred_element_type=f32)

    # DROPOUT == 0.0 -> attn/resid dropout are identity (eval-mode semantics).
    out = acc + bo_ref[...]                                                      # (T, C)
    o_ref[0] = out.astype(o_ref.dtype)


# ----------------------------- wrapper --------------------------------------
def causal_self_attention(x, params, n_head=N_HEAD):
    b, t, c = x.shape
    assert c % n_head == 0
    kernel = functools.partial(_fused_csa_kernel, n_head=n_head)
    return pl.pallas_call(
        kernel,
        out_shape=jax.ShapeDtypeStruct((b, t, c), x.dtype),
        grid=(b,),
        in_specs=[
            pl.BlockSpec((1, t, c), lambda i: (i, 0, 0)),        # x       : per-batch slab
            pl.BlockSpec((c, 3 * c), lambda i: (0, 0)),          # w_attn  : resident in VMEM
            pl.BlockSpec((1, 3 * c), lambda i: (0, 0)),          # b_attn
            pl.BlockSpec((c, c), lambda i: (0, 0)),              # w_proj
            pl.BlockSpec((1, c), lambda i: (0, 0)),              # b_proj
        ],
        out_specs=pl.BlockSpec((1, t, c), lambda i: (i, 0, 0)),  # lane-dense (T, C) output
        compiler_params=pltpu.CompilerParams(
            dimension_semantics=("parallel",),
            vmem_limit_bytes=32 * 1024 * 1024,
        ),
    )(x, params["w_attn"], params["b_attn"], params["w_proj"], params["b_proj"])


# ----------------------------- reference ------------------------------------
def reference(x, params):
    b, t, c = x.shape
    with jax.default_matmul_precision("highest"):
        qkv = x @ params["w_attn"] + params["b_attn"][0]
        q, k, v = jnp.split(qkv, 3, axis=-1)

        def heads(u):
            return u.reshape(b, t, N_HEAD, HEAD_DIM).transpose(0, 2, 1, 3)

        q, k, v = heads(q), heads(k), heads(v)
        att = (q @ k.transpose(0, 1, 3, 2)) / math.sqrt(HEAD_DIM)
        mask = jnp.tril(jnp.ones((t, t), dtype=bool))
        att = jnp.where(mask, att, -jnp.inf)
        att = jax.nn.softmax(att, axis=-1)
        y = (att @ v).transpose(0, 2, 1, 3).reshape(b, t, c)
        return y @ params["w_proj"] + params["b_proj"][0]


# ----------------------------- main -----------------------------------------
if __name__ == "__main__":
    key = jax.random.PRNGKey(0)
    k_x, k_wa, k_ba, k_wp, k_bp = jax.random.split(key, 5)

    x = jax.random.normal(k_x, (B, T, N_EMBD), dtype=jnp.float32)

    params = {
        "w_attn": 0.02 * jax.random.normal(k_wa, (N_EMBD, 3 * N_EMBD), jnp.float32),
        "b_attn": (0.01 * jax.random.normal(k_ba, (1, 3 * N_EMBD), jnp.float32)
                   if BIAS else jnp.zeros((1, 3 * N_EMBD), jnp.float32)),
        "w_proj": 0.02 * jax.random.normal(k_wp, (N_EMBD, N_EMBD), jnp.float32),
        "b_proj": (0.01 * jax.random.normal(k_bp, (1, N_EMBD), jnp.float32)
                   if BIAS else jnp.zeros((1, N_EMBD), jnp.float32)),
    }

    fwd = jax.jit(causal_self_attention)
    y = jax.block_until_ready(fwd(x, params))

    y_ref = reference(x, params)
    assert y.shape == (B, T, N_EMBD)
    max_err = float(jnp.max(jnp.abs(y - y_ref)))
    # Tolerance accounts for bf16 MXU operands (f32 accumulation) + approx reciprocal.
    assert jnp.allclose(y, y_ref, atol=2e-3, rtol=2e-2), f"mismatch vs reference (max abs err {max_err})"

    print("KERNEL_OK")
</pallas_src>

<mosaic_0001>
module attributes {stable_mosaic.version = 11 : i64} {
  func.func @_fused_csa_kernel(%arg0: i32, %arg1: memref<1x8x32xf32, #tpu.memory_space<vmem>>, %arg2: memref<32x96xf32, #tpu.memory_space<vmem>>, %arg3: memref<1x96xf32, #tpu.memory_space<vmem>>, %arg4: memref<32x32xf32, #tpu.memory_space<vmem>>, %arg5: memref<1x32xf32, #tpu.memory_space<vmem>>, %arg6: memref<1x8x32xf32, #tpu.memory_space<vmem>>) attributes {dimension_semantics = [#tpu.dimension_semantics<parallel>], iteration_bounds = array<i64: 2>, scalar_prefetch = 0 : i64, scratch_operands = 0 : i64, tpu.core_type = #tpu.core_type<tc>, window_params = [{transform_indices = @transform_0, window_bounds = array<i64: 1, 8, 32>}, {pipeline_mode = #tpu.pipeline_mode<synchronous>, transform_indices = @transform_1, window_bounds = array<i64: 32, 96>}, {pipeline_mode = #tpu.pipeline_mode<synchronous>, transform_indices = @transform_2, window_bounds = array<i64: 1, 96>}, {pipeline_mode = #tpu.pipeline_mode<synchronous>, transform_indices = @transform_3, window_bounds = array<i64: 32, 32>}, {pipeline_mode = #tpu.pipeline_mode<synchronous>, transform_indices = @transform_4, window_bounds = array<i64: 1, 32>}, {transform_indices = @transform_5, window_bounds = array<i64: 1, 8, 32>}]} {
    %c0 = arith.constant 0 : index
    %c0_0 = arith.constant 0 : index
    %c0_1 = arith.constant 0 : index
    %0 = vector.load %arg1[%c0, %c0_0, %c0_1] : memref<1x8x32xf32, #tpu.memory_space<vmem>>, vector<1x8x32xf32>
    %1 = vector.shape_cast %0 : vector<1x8x32xf32> to vector<8x32xf32>
    %2 = arith.truncf %1 : vector<8x32xf32> to vector<8x32xbf16>
    %c0_2 = arith.constant 0 : index
    %c0_3 = arith.constant 0 : index
    %3 = vector.load %arg2[%c0_2, %c0_3] : memref<32x96xf32, #tpu.memory_space<vmem>>, vector<32x96xf32>
    %4 = arith.truncf %3 : vector<32x96xf32> to vector<32x96xbf16>
    %cst = arith.constant dense<0.000000e+00> : vector<8x96xf32>
    %5 = tpu.matmul %2, %4, %cst {dimension_numbers = #tpu.dot_dimension_numbers<[1], [0], [0], [1], [0, 0, 1, 1], [], []>} : vector<8x32xbf16>, vector<32x96xbf16>, vector<8x96xf32> -> vector<8x96xf32>
    %c0_4 = arith.constant 0 : index
    %c0_5 = arith.constant 0 : index
    %6 = vector.load %arg3[%c0_4, %c0_5] : memref<1x96xf32, #tpu.memory_space<vmem>>, vector<1x96xf32>
    %7 = vector.broadcast %6 : vector<1x96xf32> to vector<8x96xf32>
    %8 = arith.addf %5, %7 : vector<8x96xf32>
    %9 = tpu.iota {dimensions = array<i32: 0>} : vector<8x8xi32>
    %10 = tpu.iota {dimensions = array<i32: 1>} : vector<8x8xi32>
    %11 = arith.cmpi sle, %10, %9 : vector<8x8xi32>
    %cst_6 = arith.constant 0.000000e+00 : f32
    %12 = vector.broadcast %cst_6 : f32 to vector<8x32xf32>
    %13 = vector.extract_strided_slice %8 {offsets = [0, 0], sizes = [8, 8], strides = [1, 1]} : vector<8x96xf32> to vector<8x8xf32>
    %cst_7 = arith.constant 0.353553385 : f32
    %14 = vector.broadcast %cst_7 : f32 to vector<8x8xf32>
    %15 = arith.mulf %13, %14 : vector<8x8xf32>
    %16 = arith.truncf %15 : vector<8x8xf32> to vector<8x8xbf16>
    %17 = vector.extract_strided_slice %8 {offsets = [0, 32], sizes = [8, 8], strides = [1, 1]} : vector<8x96xf32> to vector<8x8xf32>
    %18 = arith.truncf %17 : vector<8x8xf32> to vector<8x8xbf16>
    %19 = vector.extract_strided_slice %8 {offsets = [0, 64], sizes = [8, 8], strides = [1, 1]} : vector<8x96xf32> to vector<8x8xf32>
    %20 = arith.truncf %19 : vector<8x8xf32> to vector<8x8xbf16>
    %cst_8 = arith.constant dense<0.000000e+00> : vector<8x8xf32>
    %21 = tpu.matmul %16, %18, %cst_8 {dimension_numbers = #tpu.dot_dimension_numbers<[1], [1], [0], [0], [0, 0, 1, 0], [], []>} : vector<8x8xbf16>, vector<8x8xbf16>, vector<8x8xf32> -> vector<8x8xf32>
    %cst_9 = arith.constant -1.000000e+30 : f32
    %22 = vector.broadcast %cst_9 : f32 to vector<8x8xf32>
    %23 = arith.select %11, %21, %22 : vector<8x8xi1>, vector<8x8xf32>
    %cst_10 = arith.constant dense<0xFF800000> : vector<8xf32>
    %24 = vector.multi_reduction <maximumf>, %23, %cst_10 [1] : vector<8x8xf32> to vector<8xf32>
    %25 = vector.shape_cast %24 : vector<8xf32> to vector<8x1xf32>
    %26 = vector.broadcast %25 : vector<8x1xf32> to vector<8x8xf32>
    %27 = arith.subf %23, %26 : vector<8x8xf32>
    %28 = math.exp %27 : vector<8x8xf32>
    %cst_11 = arith.constant dense<0.000000e+00> : vector<8xf32>
    %29 = vector.multi_reduction <add>, %28, %cst_11 [1] : vector<8x8xf32> to vector<8xf32>
    %30 = vector.shape_cast %29 : vector<8xf32> to vector<8x1xf32>
    %31 = tpu.reciprocal %30 {approx = true} : vector<8x1xf32> -> vector<8x1xf32>
    %32 = vector.broadcast %31 : vector<8x1xf32> to vector<8x8xf32>
    %33 = arith.mulf %28, %32 : vector<8x8xf32>
    %34 = arith.truncf %33 : vector<8x8xf32> to vector<8x8xbf16>
    %cst_12 = arith.constant dense<0.000000e+00> : vector<8x8xf32>
    %35 = tpu.matmul %34, %20, %cst_12 {dimension_numbers = #tpu.dot_dimension_numbers<[1], [0], [0], [1], [0, 0, 1, 1], [], []>} : vector<8x8xbf16>, vector<8x8xbf16>, vector<8x8xf32> -> vector<8x8xf32>
    %c0_13 = arith.constant 0 : index
    %c0_14 = arith.constant 0 : index
    %36 = vector.load %arg4[%c0_13, %c0_14] : memref<32x32xf32, #tpu.memory_space<vmem>>, vector<8x32xf32>
    %37 = arith.truncf %36 : vector<8x32xf32> to vector<8x32xbf16>
    %38 = arith.truncf %35 : vector<8x8xf32> to vector<8x8xbf16>
    %cst_15 = arith.constant dense<0.000000e+00> : vector<8x32xf32>
    %39 = tpu.matmul %38, %37, %cst_15 {dimension_numbers = #tpu.dot_dimension_numbers<[1], [0], [0], [1], [0, 0, 1, 1], [], []>} : vector<8x8xbf16>, vector<8x32xbf16>, vector<8x32xf32> -> vector<8x32xf32>
    %40 = arith.addf %12, %39 : vector<8x32xf32>
    %41 = vector.extract_strided_slice %8 {offsets = [0, 8], sizes = [8, 8], strides = [1, 1]} : vector<8x96xf32> to vector<8x8xf32>
    %cst_16 = arith.constant 0.353553385 : f32
    %42 = vector.broadcast %cst_16 : f32 to vector<8x8xf32>
    %43 = arith.mulf %41, %42 : vector<8x8xf32>
    %44 = arith.truncf %43 : vector<8x8xf32> to vector<8x8xbf16>
    %45 = vector.extract_strided_slice %8 {offsets = [0, 40], sizes = [8, 8], strides = [1, 1]} : vector<8x96xf32> to vector<8x8xf32>
    %46 = arith.truncf %45 : vector<8x8xf32> to vector<8x8xbf16>
    %47 = vector.extract_strided_slice %8 {offsets = [0, 72], sizes = [8, 8], strides = [1, 1]} : vector<8x96xf32> to vector<8x8xf32>
    %48 = arith.truncf %47 : vector<8x8xf32> to vector<8x8xbf16>
    %cst_17 = arith.constant dense<0.000000e+00> : vector<8x8xf32>
    %49 = tpu.matmul %44, %46, %cst_17 {dimension_numbers = #tpu.dot_dimension_numbers<[1], [1], [0], [0], [0, 0, 1, 0], [], []>} : vector<8x8xbf16>, vector<8x8xbf16>, vector<8x8xf32> -> vector<8x8xf32>
    %cst_18 = arith.constant -1.000000e+30 : f32
    %50 = vector.broadcast %cst_18 : f32 to vector<8x8xf32>
    %51 = arith.select %11, %49, %50 : vector<8x8xi1>, vector<8x8xf32>
    %cst_19 = arith.constant dense<0xFF800000> : vector<8xf32>
    %52 = vector.multi_reduction <maximumf>, %51, %cst_19 [1] : vector<8x8xf32> to vector<8xf32>
    %53 = vector.shape_cast %52 : vector<8xf32> to vector<8x1xf32>
    %54 = vector.broadcast %53 : vector<8x1xf32> to vector<8x8xf32>
    %55 = arith.subf %51, %54 : vector<8x8xf32>
    %56 = math.exp %55 : vector<8x8xf32>
    %cst_20 = arith.constant dense<0.000000e+00> : vector<8xf32>
    %57 = vector.multi_reduction <add>, %56, %cst_20 [1] : vector<8x8xf32> to vector<8xf32>
    %58 = vector.shape_cast %57 : vector<8xf32> to vector<8x1xf32>
    %59 = tpu.reciprocal %58 {approx = true} : vector<8x1xf32> -> vector<8x1xf32>
    %60 = vector.broadcast %59 : vector<8x1xf32> to vector<8x8xf32>
    %61 = arith.mulf %56, %60 : vector<8x8xf32>
    %62 = arith.truncf %61 : vector<8x8xf32> to vector<8x8xbf16>
    %cst_21 = arith.constant dense<0.000000e+00> : vector<8x8xf32>
    %63 = tpu.matmul %62, %48, %cst_21 {dimension_numbers = #tpu.dot_dimension_numbers<[1], [0], [0], [1], [0, 0, 1, 1], [], []>} : vector<8x8xbf16>, vector<8x8xbf16>, vector<8x8xf32> -> vector<8x8xf32>
    %c8 = arith.constant 8 : index
    %c0_22 = arith.constant 0 : index
    %64 = vector.load %arg4[%c8, %c0_22] : memref<32x32xf32, #tpu.memory_space<vmem>>, vector<8x32xf32>
    %65 = arith.truncf %64 : vector<8x32xf32> to vector<8x32xbf16>
    %66 = arith.truncf %63 : vector<8x8xf32> to vector<8x8xbf16>
    %cst_23 = arith.constant dense<0.000000e+00> : vector<8x32xf32>
    %67 = tpu.matmul %66, %65, %cst_23 {dimension_numbers = #tpu.dot_dimension_numbers<[1], [0], [0], [1], [0, 0, 1, 1], [], []>} : vector<8x8xbf16>, vector<8x32xbf16>, vector<8x32xf32> -> vector<8x32xf32>
    %68 = arith.addf %40, %67 : vector<8x32xf32>
    %69 = vector.extract_strided_slice %8 {offsets = [0, 16], sizes = [8, 8], strides = [1, 1]} : vector<8x96xf32> to vector<8x8xf32>
    %cst_24 = arith.constant 0.353553385 : f32
    %70 = vector.broadcast %cst_24 : f32 to vector<8x8xf32>
    %71 = arith.mulf %69, %70 : vector<8x8xf32>
    %72 = arith.truncf %71 : vector<8x8xf32> to vector<8x8xbf16>
    %73 = vector.extract_strided_slice %8 {offsets = [0, 48], sizes = [8, 8], strides = [1, 1]} : vector<8x96xf32> to vector<8x8xf32>
    %74 = arith.truncf %73 : vector<8x8xf32> to vector<8x8xbf16>
    %75 = vector.extract_strided_slice %8 {offsets = [0, 80], sizes = [8, 8], strides = [1, 1]} : vector<8x96xf32> to vector<8x8xf32>
    %76 = arith.truncf %75 : vector<8x8xf32> to vector<8x8xbf16>
    %cst_25 = arith.constant dense<0.000000e+00> : vector<8x8xf32>
    %77 = tpu.matmul %72, %74, %cst_25 {dimension_numbers = #tpu.dot_dimension_numbers<[1], [1], [0], [0], [0, 0, 1, 0], [], []>} : vector<8x8xbf16>, vector<8x8xbf16>, vector<8x8xf32> -> vector<8x8xf32>
    %cst_26 = arith.constant -1.000000e+30 : f32
    %78 = vector.broadcast %cst_26 : f32 to vector<8x8xf32>
    %79 = arith.select %11, %77, %78 : vector<8x8xi1>, vector<8x8xf32>
    %cst_27 = arith.constant dense<0xFF800000> : vector<8xf32>
    %80 = vector.multi_reduction <maximumf>, %79, %cst_27 [1] : vector<8x8xf32> to vector<8xf32>
    %81 = vector.shape_cast %80 : vector<8xf32> to vector<8x1xf32>
    %82 = vector.broadcast %81 : vector<8x1xf32> to vector<8x8xf32>
    %83 = arith.subf %79, %82 : vector<8x8xf32>
    %84 = math.exp %83 : vector<8x8xf32>
    %cst_28 = arith.constant dense<0.000000e+00> : vector<8xf32>
    %85 = vector.multi_reduction <add>, %84, %cst_28 [1] : vector<8x8xf32> to vector<8xf32>
    %86 = vector.shape_cast %85 : vector<8xf32> to vector<8x1xf32>
    %87 = tpu.reciprocal %86 {approx = true} : vector<8x1xf32> -> vector<8x1xf32>
    %88 = vector.broadcast %87 : vector<8x1xf32> to vector<8x8xf32>
    %89 = arith.mulf %84, %88 : vector<8x8xf32>
    %90 = arith.truncf %89 : vector<8x8xf32> to vector<8x8xbf16>
    %cst_29 = arith.constant dense<0.000000e+00> : vector<8x8xf32>
    %91 = tpu.matmul %90, %76, %cst_29 {dimension_numbers = #tpu.dot_dimension_numbers<[1], [0], [0], [1], [0, 0, 1, 1], [], []>} : vector<8x8xbf16>, vector<8x8xbf16>, vector<8x8xf32> -> vector<8x8xf32>
    %c16 = arith.constant 16 : index
    %c0_30 = arith.constant 0 : index
    %92 = vector.load %arg4[%c16, %c0_30] : memref<32x32xf32, #tpu.memory_space<vmem>>, vector<8x32xf32>
    %93 = arith.truncf %92 : vector<8x32xf32> to vector<8x32xbf16>
    %94 = arith.truncf %91 : vector<8x8xf32> to vector<8x8xbf16>
    %cst_31 = arith.constant dense<0.000000e+00> : vector<8x32xf32>
    %95 = tpu.matmul %94, %93, %cst_31 {dimension_numbers = #tpu.dot_dimension_numbers<[1], [0], [0], [1], [0, 0, 1, 1], [], []>} : vector<8x8xbf16>, vector<8x32xbf16>, vector<8x32xf32> -> vector<8x32xf32>
    %96 = arith.addf %68, %95 : vector<8x32xf32>
    %97 = vector.extract_strided_slice %8 {offsets = [0, 24], sizes = [8, 8], strides = [1, 1]} : vector<8x96xf32> to vector<8x8xf32>
    %cst_32 = arith.constant 0.353553385 : f32
    %98 = vector.broadcast %cst_32 : f32 to vector<8x8xf32>
    %99 = arith.mulf %97, %98 : vector<8x8xf32>
    %100 = arith.truncf %99 : vector<8x8xf32> to vector<8x8xbf16>
    %101 = vector.extract_strided_slice %8 {offsets = [0, 56], sizes = [8, 8], strides = [1, 1]} : vector<8x96xf32> to vector<8x8xf32>
    %102 = arith.truncf %101 : vector<8x8xf32> to vector<8x8xbf16>
    %103 = vector.extract_strided_slice %8 {offsets = [0, 88], sizes = [8, 8], strides = [1, 1]} : vector<8x96xf32> to vector<8x8xf32>
    %104 = arith.truncf %103 : vector<8x8xf32> to vector<8x8xbf16>
    %cst_33 = arith.constant dense<0.000000e+00> : vector<8x8xf32>
    %105 = tpu.matmul %100, %102, %cst_33 {dimension_numbers = #tpu.dot_dimension_numbers<[1], [1], [0], [0], [0, 0, 1, 0], [], []>} : vector<8x8xbf16>, vector<8x8xbf16>, vector<8x8xf32> -> vector<8x8xf32>
    %cst_34 = arith.constant -1.000000e+30 : f32
    %106 = vector.broadcast %cst_34 : f32 to vector<8x8xf32>
    %107 = arith.select %11, %105, %106 : vector<8x8xi1>, vector<8x8xf32>
    %cst_35 = arith.constant dense<0xFF800000> : vector<8xf32>
    %108 = vector.multi_reduction <maximumf>, %107, %cst_35 [1] : vector<8x8xf32> to vector<8xf32>
    %109 = vector.shape_cast %108 : vector<8xf32> to vector<8x1xf32>
    %110 = vector.broadcast %109 : vector<8x1xf32> to vector<8x8xf32>
    %111 = arith.subf %107, %110 : vector<8x8xf32>
    %112 = math.exp %111 : vector<8x8xf32>
    %cst_36 = arith.constant dense<0.000000e+00> : vector<8xf32>
    %113 = vector.multi_reduction <add>, %112, %cst_36 [1] : vector<8x8xf32> to vector<8xf32>
    %114 = vector.shape_cast %113 : vector<8xf32> to vector<8x1xf32>
    %115 = tpu.reciprocal %114 {approx = true} : vector<8x1xf32> -> vector<8x1xf32>
    %116 = vector.broadcast %115 : vector<8x1xf32> to vector<8x8xf32>
    %117 = arith.mulf %112, %116 : vector<8x8xf32>
    %118 = arith.truncf %117 : vector<8x8xf32> to vector<8x8xbf16>
    %cst_37 = arith.constant dense<0.000000e+00> : vector<8x8xf32>
    %119 = tpu.matmul %118, %104, %cst_37 {dimension_numbers = #tpu.dot_dimension_numbers<[1], [0], [0], [1], [0, 0, 1, 1], [], []>} : vector<8x8xbf16>, vector<8x8xbf16>, vector<8x8xf32> -> vector<8x8xf32>
    %c24 = arith.constant 24 : index
    %c0_38 = arith.constant 0 : index
    %120 = vector.load %arg4[%c24, %c0_38] : memref<32x32xf32, #tpu.memory_space<vmem>>, vector<8x32xf32>
    %121 = arith.truncf %120 : vector<8x32xf32> to vector<8x32xbf16>
    %122 = arith.truncf %119 : vector<8x8xf32> to vector<8x8xbf16>
    %cst_39 = arith.constant dense<0.000000e+00> : vector<8x32xf32>
    %123 = tpu.matmul %122, %121, %cst_39 {dimension_numbers = #tpu.dot_dimension_numbers<[1], [0], [0], [1], [0, 0, 1, 1], [], []>} : vector<8x8xbf16>, vector<8x32xbf16>, vector<8x32xf32> -> vector<8x32xf32>
    %124 = arith.addf %96, %123 : vector<8x32xf32>
    %c0_40 = arith.constant 0 : index
    %c0_41 = arith.constant 0 : index
    %125 = vector.load %arg5[%c0_40, %c0_41] : memref<1x32xf32, #tpu.memory_space<vmem>>, vector<1x32xf32>
    %126 = vector.broadcast %125 : vector<1x32xf32> to vector<8x32xf32>
    %127 = arith.addf %124, %126 : vector<8x32xf32>
    %c0_42 = arith.constant 0 : index
    %c0_43 = arith.constant 0 : index
    %c0_44 = arith.constant 0 : index
    %128 = vector.load %arg6[%c0_42, %c0_43, %c0_44] : memref<1x8x32xf32, #tpu.memory_space<vmem>>, vector<1x8x32xf32>
    %129 = vector.shape_cast %128 : vector<1x8x32xf32> to vector<8x32xf32>
    %130 = vector.shape_cast %127 : vector<8x32xf32> to vector<1x8x32xf32>
    tpu.vector_store %arg6[%c0_42, %c0_43, %c0_44], %130 {strides = array<i32>} : memref<1x8x32xf32, #tpu.memory_space<vmem>>, vector<1x8x32xf32>,
    return
  }
  func.func @transform_0(%arg0: i32) -> (i32, i32, i32) {
    %c0_i32 = arith.constant 0 : i32
    %c0_i32_0 = arith.constant 0 : i32
    %c0_i32_1 = arith.constant 0 : i32
    return %arg0, %c0_i32, %c0_i32_0 : i32, i32, i32
  }
  func.func @transform_1(%arg0: i32) -> (i32, i32) {
    %c0_i32 = arith.constant 0 : i32
    %c0_i32_0 = arith.constant 0 : i32
    %c0_i32_1 = arith.constant 0 : i32
    return %c0_i32, %c0_i32_0 : i32, i32
  }
  func.func @transform_2(%arg0: i32) -> (i32, i32) {
    %c0_i32 = arith.constant 0 : i32
    %c0_i32_0 = arith.constant 0 : i32
    %c0_i32_1 = arith.constant 0 : i32
    return %c0_i32, %c0_i32_0 : i32, i32
  }
  func.func @transform_3(%arg0: i32) -> (i32, i32) {
    %c0_i32 = arith.constant 0 : i32
    %c0_i32_0 = arith.constant 0 : i32
    %c0_i32_1 = arith.constant 0 : i32
    return %c0_i32, %c0_i32_0 : i32, i32
  }
  func.func @transform_4(%arg0: i32) -> (i32, i32) {
    %c0_i32 = arith.constant 0 : i32
    %c0_i32_0 = arith.constant 0 : i32
    %c0_i32_1 = arith.constant 0 : i32
    return %c0_i32, %c0_i32_0 : i32, i32
  }
  func.func @transform_5(%arg0: i32) -> (i32, i32, i32) {
    %c0_i32 = arith.constant 0 : i32
    %c0_i32_0 = arith.constant 0 : i32
    %c0_i32_1 = arith.constant 0 : i32
    return %arg0, %c0_i32, %c0_i32_0 : i32, i32, i32
  }
}

</mosaic_0001>

<llo_original>
// kernel: causal_self_attention.1
$region0: #{causal_self_attention.1}
  #allocation0 [shape = 'u32[]', space=smem, size = 0x4, offset = 0x4, fixed_abs, tag = 'smem constant byte address 0x4 - core index']
  #allocation1 [shape = 'u32[144,128]{1,0:T(1,128)}', space=vmem, size = 0x12000, scoped, tag = 'internal scratch']
  %s0 = inlined_call_operand.hbm [shape: f32[2,8,32], index: 0, kind: input, shape index: {}]
  %s1 = inlined_call_operand.hbm [shape: f32[32,96], index: 1, kind: input, shape index: {}]
  %s2 = inlined_call_operand.vmem [shape: f32[1,96], index: 2, kind: input, shape index: {}]
  %s3 = inlined_call_operand.hbm [shape: f32[32,32], index: 3, kind: input, shape index: {}]
  %s4 = inlined_call_operand.vmem [shape: f32[1,32], index: 4, kind: input, shape index: {}]
  %s5 = inlined_call_operand.hbm [shape: f32[2,8,32], index: 5, kind: output, shape index: {}]
  %s6 = sld [smem:[#allocation0]]
  $region65: #{causal_self_attention.1} parent=0
    _
  %s8 = ssub.s32 1, %s6
  %s9 = scalar_select 0, %s8, %s6
  $region1: #{causal_self_attention.1} parent=0
    #allocation2 [shape = 'u8[8192]{0}', space=vmem, size = 0x2000, scoped, tag = 'input window, operand 0']
    #allocation3 [shape = 's32[2]{0}', space=sflag, size = 0x8, scoped, tag = 'scoped memory for causal_self_attention.1']
    #allocation4 [shape = 's32[2]{0}', space=sflag, size = 0x8, scoped, tag = 'scoped memory for causal_self_attention.1']
    #allocation5 [shape = 'u8[16384]{0}', space=vmem, size = 0x4000, scoped, tag = 'input window, operand 1, single buffered']
    #allocation6 [shape = 's32[1]{0}', space=sflag, size = 0x4, scoped, tag = 'scoped memory for causal_self_attention.1']
    #allocation7 [shape = 'u8[16384]{0}', space=vmem, size = 0x4000, scoped, tag = 'input window, operand 3, single buffered']
    #allocation8 [shape = 'u8[8192]{0}', space=vmem, size = 0x2000, scoped, tag = 'output window, operand 0']
    %10 = vsyncpa [#allocation3], 0
    %s11 = scalar_lea.sflag [#allocation3], 1
    %12 = vsyncpa %s11, 0
    %13 = vsyncpa [#allocation6], 0
    %14 = vsyncpa [#allocation4], 0
    %s15 = scalar_lea.sflag [#allocation4], 1
    %16 = vsyncpa %s15, 0
    loop: start=0, step=1, limit=4
    $region2: #{causal_self_attention.1} parent=1 // loop_pre_header
      _
    $region3: #{causal_self_attention.1} parent=1 // loop_header
      %s18 = sphi 0, %s22
      %p19 = scmp.ge.s32.totalorder %s18, 4
      %s28 = sphi 0, %s30
      %s31 = sphi 0, %s28
      %s32 = sphi 0, %s31
      %s48 = sphi 0, %s32
      %s52 = sphi 0, %s52
      %s54 = sphi 0, %s52
      %s55 = sphi 0, %s54
      %s69 = sphi 0, %s55
      %s73 = sphi 0, %s73
      %s75 = sphi 0, %s73
      %s76 = sphi 0, %s75
      %s90 = sphi 0, %s76
      %s94 = sphi 0, %s94
      %s96 = sphi 0, %s94
      %s97 = sphi 0, %s96
      %s111 = sphi 0, %s97
      %s115 = sphi 0, %s115
      %s117 = sphi 0, %s115
      %s118 = sphi 0, %s117
      %s132 = sphi 0, %s118
      %s138 = sphi 0, %s140
      %s141 = sphi 0, %s138
      %s142 = sphi 0, %s141
      %s158 = sphi 0, %s142
    $region4: #{causal_self_attention.1} parent=1 // loop_header_branch
      %21 = sbr.rel (%p19) target = $region8
    $region5: #{causal_self_attention.1} parent=1 // loop_body
      %s23 = ssub.s32 %s18, 1
      %s24 = ssub.s32 %s18, 2
      %s25 = sadd.s32 %s18, 1
      %s26 = ssub.s32 %s18, %s25
      %p27 = scmp.eq.s32.totalorder %s26, 0
      %s29 = sadd.s32 %s28, 1
      %s30 = scalar_select %p27, %s28, %s29
      %p33 = pneg %p27
      %p34 = scmp.eq.s32.totalorder %s18, 1
      %p35 = por %p33, %p34
      %p36 = scmp.ne.s32.totalorder %s28, %s31
      %p37 = scmp.eq.s32.totalorder %s18, 0
      %p38 = por %p36, %p37
      %p39 = scmp.ne.s32.totalorder %s28, %s31
      %p40 = scmp.eq.s32.totalorder %s23, 1
      %p41 = por %p39, %p40
      %p42 = scmp.ne.s32.totalorder %s31, %s32
      %p43 = scmp.eq.s32.totalorder %s23, 0
      %p44 = por %p42, %p43
      %p45 = scmp.ne.s32.totalorder %s31, %s32
      %p46 = scmp.eq.s32.totalorder %s24, 1
      %p47 = por %p45, %p46
      %p49 = scmp.ne.s32.totalorder %s32, %s48
      %p50 = scmp.eq.s32.totalorder %s24, 0
      %p51 = por %p49, %p50
      %s53 = sadd.s32 %s52, 1
      %p56 = scmp.eq.s32.totalorder %s18, 1
      %p57 = scmp.ne.s32.totalorder %s52, %s54
      %p58 = scmp.eq.s32.totalorder %s18, 0
      %p59 = por %p57, %p58
      %p60 = scmp.ne.s32.totalorder %s52, %s54
      %p61 = scmp.eq.s32.totalorder %s23, 1
      %p62 = por %p60, %p61
      %p63 = scmp.ne.s32.totalorder %s54, %s55
      %p64 = scmp.eq.s32.totalorder %s23, 0
      %p65 = por %p63, %p64
      %p66 = scmp.ne.s32.totalorder %s54, %s55
      %p67 = scmp.eq.s32.totalorder %s24, 1
      %p68 = por %p66, %p67
      %p70 = scmp.ne.s32.totalorder %s55, %s69
      %p71 = scmp.eq.s32.totalorder %s24, 0
      %p72 = por %p70, %p71
      %s74 = sadd.s32 %s73, 1
      %p77 = scmp.eq.s32.totalorder %s18, 1
      %p78 = scmp.ne.s32.totalorder %s73, %s75
      %p79 = scmp.eq.s32.totalorder %s18, 0
      %p80 = por %p78, %p79
      %p81 = scmp.ne.s32.totalorder %s73, %s75
      %p82 = scmp.eq.s32.totalorder %s23, 1
      %p83 = por %p81, %p82
      %p84 = scmp.ne.s32.totalorder %s75, %s76
      %p85 = scmp.eq.s32.totalorder %s23, 0
      %p86 = por %p84, %p85
      %p87 = scmp.ne.s32.totalorder %s75, %s76
      %p88 = scmp.eq.s32.totalorder %s24, 1
      %p89 = por %p87, %p88
      %p91 = scmp.ne.s32.totalorder %s76, %s90
      %p92 = scmp.eq.s32.totalorder %s24, 0
      %p93 = por %p91, %p92
      %s95 = sadd.s32 %s94, 1
      %p98 = scmp.eq.s32.totalorder %s18, 1
      %p99 = scmp.ne.s32.totalorder %s94, %s96
      %p100 = scmp.eq.s32.totalorder %s18, 0
      %p101 = por %p99, %p100
      %p102 = scmp.ne.s32.totalorder %s94, %s96
      %p103 = scmp.eq.s32.totalorder %s23, 1
      %p104 = por %p102, %p103
      %p105 = scmp.ne.s32.totalorder %s96, %s97
      %p106 = scmp.eq.s32.totalorder %s23, 0
      %p107 = por %p105, %p106
      %p108 = scmp.ne.s32.totalorder %s96, %s97
      %p109 = scmp.eq.s32.totalorder %s24, 1
      %p110 = por %p108, %p109
      %p112 = scmp.ne.s32.totalorder %s97, %s111
      %p113 = scmp.eq.s32.totalorder %s24, 0
      %p114 = por %p112, %p113
      %s116 = sadd.s32 %s115, 1
      %p119 = scmp.eq.s32.totalorder %s18, 1
      %p120 = scmp.ne.s32.totalorder %s115, %s117
      %p121 = scmp.eq.s32.totalorder %s18, 0
      %p122 = por %p120, %p121
      %p123 = scmp.ne.s32.totalorder %s115, %s117
      %p124 = scmp.eq.s32.totalorder %s23, 1
      %p125 = por %p123, %p124
      %p126 = scmp.ne.s32.totalorder %s117, %s118
      %p127 = scmp.eq.s32.totalorder %s23, 0
      %p128 = por %p126, %p127
      %p129 = scmp.ne.s32.totalorder %s117, %s118
      %p130 = scmp.eq.s32.totalorder %s24, 1
      %p131 = por %p129, %p130
      %p133 = scmp.ne.s32.totalorder %s118, %s132
      %p134 = scmp.eq.s32.totalorder %s24, 0
      %p135 = por %p133, %p134
      %s136 = ssub.s32 %s18, %s25
      %p137 = scmp.eq.s32.totalorder %s136, 0
      %s139 = sadd.s32 %s138, 1
      %s140 = scalar_select %p137, %s138, %s139
      %p143 = pneg %p137
      %p144 = scmp.eq.s32.totalorder %s18, 1
      %p145 = por %p143, %p144
      %p146 = scmp.ne.s32.totalorder %s138, %s141
      %p147 = scmp.eq.s32.totalorder %s18, 0
      %p148 = por %p146, %p147
      %p149 = scmp.ne.s32.totalorder %s138, %s141
      %p150 = scmp.eq.s32.totalorder %s23, 1
      %p151 = por %p149, %p150
      %p152 = scmp.ne.s32.totalorder %s141, %s142
      %p153 = scmp.eq.s32.totalorder %s23, 0
      %p154 = por %p152, %p153
      %p155 = scmp.ne.s32.totalorder %s141, %s142
      %p156 = scmp.eq.s32.totalorder %s24, 1
      %p157 = por %p155, %p156
      %p159 = scmp.ne.s32.totalorder %s142, %s158
      %p160 = scmp.eq.s32.totalorder %s24, 0
      %p161 = por %p159, %p160
      %p162 = scmp.le.s32.totalorder 1, %s18
      %p163 = scmp.lt.s32.totalorder %s18, 3
      %p164 = pnand %p162, %p163
      %p165 = pneg %p164
      // Predicated region
      $region9: #{causal_self_attention.1} parent=5 // pred_check
        _
      $region10: #{causal_self_attention.1} parent=5 // pred_check_branch
        %167 = sbr.rel (%p164) target = $region12
      $region11: #{causal_self_attention.1} parent=5 // pred_region
        %s168 = ssub.s32 %s18, 1
        // Predicated region
        $region13: #{causal_self_attention.1} parent=11 // pred_check
          %p169 = pneg %p65
        $region14: #{causal_self_attention.1} parent=11 // pred_check_branch
          %171 = sbr.rel (%p169) target = $region16
        $region15: #{causal_self_attention.1} parent=11 // pred_region
          %s173 = ssub.s32 512, 512
          %174 = vsyncadd [#allocation6], %s173
          %s175 = sshll.u32 [#allocation5], 4
          %s176 = int_to_ptr.vmem [resolvable:$true] %s175
          %181 = dma.hbm_to_vmem [thread:$0]  %s1, 512, %s176, [#allocation6], 128, 128, 8
        $region16: #{causal_self_attention.1} parent=11 // pred_fallthru
          _
        // Predicated region
        $region17: #{causal_self_attention.1} parent=11 // pred_check
          %p182 = pneg %p86
        $region18: #{causal_self_attention.1} parent=11 // pred_check_branch
          %184 = sbr.rel (%p182) target = $region20
        $region19: #{causal_self_attention.1} parent=11 // pred_region
          _
        $region20: #{causal_self_attention.1} parent=11 // pred_fallthru
          _
        // Predicated region
        $region21: #{causal_self_attention.1} parent=11 // pred_check
          %p185 = pneg %p107
        $region22: #{causal_self_attention.1} parent=11 // pred_check_branch
          %187 = sbr.rel (%p185) target = $region24
        $region23: #{causal_self_attention.1} parent=11 // pred_region
          %s189 = ssub.s32 512, 512
          %190 = vsyncadd [#allocation6], %s189
          %s191 = sshll.u32 [#allocation7], 4
          %s192 = int_to_ptr.vmem [resolvable:$true] %s191
          %197 = dma.hbm_to_vmem [thread:$0]  %s3, 512, %s192, [#allocation6], 128, 128, 8
        $region24: #{causal_self_attention.1} parent=11 // pred_fallthru
          _
        // Predicated region
        $region25: #{causal_self_attention.1} parent=11 // pred_check
          %p198 = pneg %p128
        $region26: #{causal_self_attention.1} parent=11 // pred_check_branch
          %200 = sbr.rel (%p198) target = $region28
        $region27: #{causal_self_attention.1} parent=11 // pred_region
          _
        $region28: #{causal_self_attention.1} parent=11 // pred_fallthru
          _
      $region12: #{causal_self_attention.1} parent=5 // pred_fallthru
        _
      %p201 = scmp.lt.s32.totalorder %s18, 2
      // Predicated region
      $region29: #{causal_self_attention.1} parent=5 // pred_check
        %p202 = pneg %p201
      $region30: #{causal_self_attention.1} parent=5 // pred_check_branch
        %204 = sbr.rel (%p202) target = $region32
      $region31: #{causal_self_attention.1} parent=5 // pred_region
        // Predicated region
        $region33: #{causal_self_attention.1} parent=31 // pred_check
          %p205 = pneg %p38
        $region34: #{causal_self_attention.1} parent=31 // pred_check_branch
          %207 = sbr.rel (%p205) target = $region36
        $region35: #{causal_self_attention.1} parent=31 // pred_region
          %s208 = sand.u32 %s28, 1
          %s209 = scalar_lea.sflag [#allocation3], %s208
          %s210 = sand.u32 %s28, 1
          %s211 = smul.addr %s210, 8
          %s212 = scalar_lea.vmem [#allocation2], %s211
          %s214 = ssub.s32 128, 128
          %215 = vsyncadd %s209, %s214
          %s216 = smul.addr %s18, 128
          %s217 = scalar_lea.hbm %s0, %s216
          %s219 = sshll.u32 %s212, 4
          %s220 = int_to_ptr.vmem [resolvable:$true] %s219
          %222 = dma.hbm_to_vmem [thread:$0]  %s217, 128, %s220, %s209
        $region36: #{causal_self_attention.1} parent=31 // pred_fallthru
          _
      $region32: #{causal_self_attention.1} parent=5 // pred_fallthru
        _
      %p223 = scmp.le.s32.totalorder 1, %s18
      %p224 = scmp.lt.s32.totalorder %s18, 3
      %p225 = pnand %p223, %p224
      %p226 = pneg %p225
      // Predicated region
      $region37: #{causal_self_attention.1} parent=5 // pred_check
        _
      $region38: #{causal_self_attention.1} parent=5 // pred_check_branch
        %228 = sbr.rel (%p225) target = $region40
      $region39: #{causal_self_attention.1} parent=5 // pred_region
        %s229 = ssub.s32 %s18, 1
        %s230 = sand.u32 %s31, 1
        %s231 = scalar_lea.sflag [#allocation3], %s230
        %s232 = sand.u32 %s31, 1
        %s233 = smul.addr %s232, 8
        %s234 = scalar_lea.vmem [#allocation2], %s233
        // Predicated region
        $region41: #{causal_self_attention.1} parent=39 // pred_check
          %p235 = pneg %p44
        $region42: #{causal_self_attention.1} parent=39 // pred_check_branch
          %237 = sbr.rel (%p235) target = $region44
        $region43: #{causal_self_attention.1} parent=39 // pred_region
          %238 = dma.done %s231, 128
        $region44: #{causal_self_attention.1} parent=39 // pred_fallthru
          _
        // Predicated region
        $region45: #{causal_self_attention.1} parent=39 // pred_check
          %p239 = pneg %p65
        $region46: #{causal_self_attention.1} parent=39 // pred_check_branch
          %241 = sbr.rel (%p239) target = $region48
        $region47: #{causal_self_attention.1} parent=39 // pred_region
          %242 = dma.done [#allocation6], 512
        $region48: #{causal_self_attention.1} parent=39 // pred_fallthru
          _
        // Predicated region
        $region49: #{causal_self_attention.1} parent=39 // pred_check
          %p243 = pneg %p107
        $region50: #{causal_self_attention.1} parent=39 // pred_check_branch
          %245 = sbr.rel (%p243) target = $region52
        $region51: #{causal_self_attention.1} parent=39 // pred_region
          %246 = dma.done [#allocation6], 512
        $region52: #{causal_self_attention.1} parent=39 // pred_fallthru
          _
        %s247 = sand.u32 %s31, 1
        %s248 = scalar_lea.sflag [#allocation3], %s247
        %s249 = sand.u32 %s31, 1
        %s250 = smul.addr %s249, 8
        %s251 = scalar_lea.vmem [#allocation2], %s250
        %p252 = pneg %p44
        %p253 = pneg %p41
        %p254 = pneg %p65
        %p255 = pneg %p62
        %p256 = pneg %p86
        %p257 = pneg %p83
        %p258 = pneg %p107
        %p259 = pneg %p104
        %p260 = pneg %p128
        %p261 = pneg %p125
        %p262 = pneg %p154
        %p263 = pneg %p151
        %s264 = sand.u32 %s141, 1
        %s265 = scalar_lea.sflag [#allocation4], %s264
        %s266 = sand.u32 %s141, 1
        %s267 = smul.addr %s266, 8
        %s268 = scalar_lea.vmem [#allocation8], %s267
        %v270 = vld [vmem:[%s234] sm:$0xff]
        %v271 = vpack.c.bf16 %v270, %v270
        %v272 = vld [vmem:[#allocation5] sm:$0xff]
        %v273 = vld [vmem:[#allocation5 + $0x8] sm:$0xff]
        %v274 = vld [vmem:[#allocation5 + $0x10] sm:$0xff]
        %v275 = vld [vmem:[#allocation5 + $0x18] sm:$0xff]
        %v276 = vpack.c.bf16 %v273, %v272
        %v277 = vpack.c.bf16 %v275, %v274
        %v278 = vld [vmem:[%s2] sm:$0x1]
        %v280 = vlaneseq
        %v281 = vshrl.u32 %v280, 7
        %v282 = vsub.s32 0, %v281
        %v283 = vrot.slane %v278, %v282
        %vm285 = vcmask 261120
        %v287 = vsel %vm285, %v271, 0
        %289 = vmatprep.subr.bf16.mxu0 0
        %290 = vmatpush1.bf16.msra.mxu0 %v276
        %291 = vmatprep.subr.bf16.mxu0 0
        %292 = vmatpush1.bf16.msra.mxu0 %v277
        %293 = vmatprep.subr.bf16.mxu0 0
        %294 = vmatpush1.bf16.msra.mxu0 0
        %295 = vmatprep.subr.bf16.mxu0 0
        %296 = vmatpush1.bf16.msra.mxu0 0
        %297 = vmatprep.subr.bf16.mxu0 0
        %298 = vmatpush1.bf16.msra.mxu0 0
        %299 = vmatprep.subr.bf16.mxu0 0
        %300 = vmatpush1.bf16.msra.mxu0 0
        %301 = vmatprep.subr.bf16.mxu0 0
        %302 = vmatpush1.bf16.msra.mxu0 0
        %303 = vmatprep.subr.bf16.mxu0 0
        %304 = vmatpush1.bf16.msra.mxu0 0
        %305 = vmatprep.subr.bf16.mxu0 0
        %306 = vmatpush1.bf16.msra.mxu0 0
        %307 = vmatprep.subr.bf16.mxu0 0
        %308 = vmatpush1.bf16.msra.mxu0 0
        %309 = vmatprep.subr.bf16.mxu0 0
        %310 = vmatpush1.bf16.msra.mxu0 0
        %311 = vmatprep.subr.bf16.mxu0 0
        %312 = vmatpush1.bf16.msra.mxu0 0
        %313 = vmatprep.subr.bf16.mxu0 0
        %314 = vmatpush1.bf16.msra.mxu0 0
        %315 = vmatprep.subr.bf16.mxu0 0
        %316 = vmatpush1.bf16.msra.mxu0 0
        %317 = vmatprep.subr.bf16.mxu0 0
        %318 = vmatpush1.bf16.msra.mxu0 0
        %319 = vmatprep.subr.bf16.mxu0 0
        %320 = vmatpush1.bf16.msra.mxu0 0
        %321 = vmatprep.mubr.bf16.mxu0 0
        %322 = vmatmul.mubr.bf16.gmra.mrb[0].mxu0 %v287
        %v323 = vpop.f32.mrb[0].mxu0
        %v324 = vadd.f32 %v283, %v323
        %v325 = vpop.f32.mrb[0].mxu0
        %v326 = vpop.f32.mrb[0].mxu0
        %v327 = vpop.f32.mrb[0].mxu0
        %328 = vdwg.mxu0
        %v329 = vlaneseq
        %v330 = vshrl.u32 %v329, 7
        %v331 = vlaneseq
        %v332 = vand.u32 %v331, 127
        %vm333 = vcmp.le.s32.totalorder %v332, %v330
        %v334 = vmul.f32 %v324, 0.35355338
        %v335 = vpack.c.bf16 %v334, %v334
        %v336 = vpack.c.bf16 %v324, %v324
        %338 = vrot.lane.b32.xlu0 %v336, 96
        %v339 = vpop.permute.xlu0 %338
        %vm340 = vcmask 64512
        %v342 = vsel %vm340, %v335, 0
        %v345 = vsel %vm340, %v339, 0
        %347 = vmatprep.subr.bf16.mxu0 0
        %348 = vmatpush1.bf16.xpose.msra.mxu0 %v345
        %349 = vmatprep.subr.bf16.mxu0 0
        %350 = vmatpush1.bf16.xpose.msra.mxu0 0
        %351 = vmatprep.subr.bf16.mxu0 0
        %352 = vmatpush1.bf16.xpose.msra.mxu0 0
        %353 = vmatprep.subr.bf16.mxu0 0
        %354 = vmatpush1.bf16.xpose.msra.mxu0 0
        %355 = vmatprep.subr.bf16.mxu0 0
        %356 = vmatpush1.bf16.xpose.msra.mxu0 0
        %357 = vmatprep.subr.bf16.mxu0 0
        %358 = vmatpush1.bf16.xpose.msra.mxu0 0
        %359 = vmatprep.subr.bf16.mxu0 0
        %360 = vmatpush1.bf16.xpose.msra.mxu0 0
        %361 = vmatprep.subr.bf16.mxu0 0
        %362 = vmatpush1.bf16.xpose.msra.mxu0 0
        %363 = vmatprep.subr.bf16.mxu0 0
        %364 = vmatpush1.bf16.xpose.msra.mxu0 0
        %365 = vmatprep.subr.bf16.mxu0 0
        %366 = vmatpush1.bf16.xpose.msra.mxu0 0
        %367 = vmatprep.subr.bf16.mxu0 0
        %368 = vmatpush1.bf16.xpose.msra.mxu0 0
        %369 = vmatprep.subr.bf16.mxu0 0
        %370 = vmatpush1.bf16.xpose.msra.mxu0 0
        %371 = vmatprep.subr.bf16.mxu0 0
        %372 = vmatpush1.bf16.xpose.msra.mxu0 0
        %373 = vmatprep.subr.bf16.mxu0 0
        %374 = vmatpush1.bf16.xpose.msra.mxu0 0
        %375 = vmatprep.subr.bf16.mxu0 0
        %376 = vmatpush1.bf16.xpose.msra.mxu0 0
        %377 = vmatprep.subr.bf16.mxu0 0
        %378 = vmatpush1.bf16.xpose.msra.mxu0 0
        %379 = vmatprep.mubr.bf16.mxu0 0
        %380 = vmatmul.mubr.bf16.gmra.mrb[0].mxu0 %v342
        %v381 = vpop.f32.mrb[0].mxu0
        %v382 = vadd.f32 0.0, %v381
        %v383 = vpop.f32.mrb[0].mxu0
        %v384 = vpop.f32.mrb[0].mxu0
        %v385 = vpop.f32.mrb[0].mxu0
        %386 = vdwg.mxu0
        %v387 = vsel %vm333, %v382, -1e+30
        %v388 = vsel %vm340, %v387, -inf
        %389 = vmax.xlane.f32.xlu0 %v388
        %v390 = vpop.xlane.xlu0 %389
        %v391 = vsub.f32 %v387, %v390
        %v392 = vmul.f32 %v391, 1.442695
        %v393 = vpow.pop %v392
        %v394 = vsel %vm340, %v393, 0.0
        %395 = vadd.xlane.f32.xlu0 %v394
        %v396 = vpop.xlane.xlu0 %395
        %v397 = vrcp.pop %v396
        %v398 = vmul.f32 %v393, %v397
        %v399 = vpack.c.bf16 %v398, %v398
        %400 = vrot.lane.b32.xlu0 %v336, 64
        %v401 = vpop.permute.xlu0 %400
        %v403 = vsel %vm340, %v399, 0
        %vm405 = vcmask 1043456
        %v407 = vsel %vm405, %v401, 0
        %409 = vmatprep.subr.bf16.mxu0 0
        %410 = vmatpush1.bf16.msra.mxu0 %v407
        %411 = vmatprep.subr.bf16.mxu0 0
        %412 = vmatpush1.bf16.msra.mxu0 0
        %413 = vmatprep.subr.bf16.mxu0 0
        %414 = vmatpush1.bf16.msra.mxu0 0
        %415 = vmatprep.subr.bf16.mxu0 0
        %416 = vmatpush1.bf16.msra.mxu0 0
        %417 = vmatprep.subr.bf16.mxu0 0
        %418 = vmatpush1.bf16.msra.mxu0 0
        %419 = vmatprep.subr.bf16.mxu0 0
        %420 = vmatpush1.bf16.msra.mxu0 0
        %421 = vmatprep.subr.bf16.mxu0 0
        %422 = vmatpush1.bf16.msra.mxu0 0
        %423 = vmatprep.subr.bf16.mxu0 0
        %424 = vmatpush1.bf16.msra.mxu0 0
        %425 = vmatprep.subr.bf16.mxu0 0
        %426 = vmatpush1.bf16.msra.mxu0 0
        %427 = vmatprep.subr.bf16.mxu0 0
        %428 = vmatpush1.bf16.msra.mxu0 0
        %429 = vmatprep.subr.bf16.mxu0 0
        %430 = vmatpush1.bf16.msra.mxu0 0
        %431 = vmatprep.subr.bf16.mxu0 0
        %432 = vmatpush1.bf16.msra.mxu0 0
        %433 = vmatprep.subr.bf16.mxu0 0
        %434 = vmatpush1.bf16.msra.mxu0 0
        %435 = vmatprep.subr.bf16.mxu0 0
        %436 = vmatpush1.bf16.msra.mxu0 0
        %437 = vmatprep.subr.bf16.mxu0 0
        %438 = vmatpush1.bf16.msra.mxu0 0
        %439 = vmatprep.subr.bf16.mxu0 0
        %440 = vmatpush1.bf16.msra.mxu0 0
        %441 = vmatprep.mubr.bf16.mxu0 0
        %442 = vmatmul.mubr.bf16.gmra.mrb[0].mxu0 %v403
        %v443 = vpop.f32.mrb[0].mxu0
        %v444 = vadd.f32 0.0, %v443
        %v445 = vpop.f32.mrb[0].mxu0
        %v446 = vpop.f32.mrb[0].mxu0
        %v447 = vpop.f32.mrb[0].mxu0
        %448 = vdwg.mxu0
        %v449 = vld [vmem:[#allocation7] sm:$0xff]
        %v450 = vpack.c.bf16 %v449, %v449
        %v451 = vpack.c.bf16 %v444, %v444
        %453 = vrot.lane.b32.xlu0 %v335, 120
        %v454 = vpop.permute.xlu0 %453
        %455 = vrot.lane.b32.xlu0 %v336, 88
        %v456 = vpop.permute.xlu0 %455
        %v458 = vsel %vm340, %v454, 0
        %v461 = vsel %vm340, %v456, 0
        %463 = vmatprep.subr.bf16.mxu0 0
        %464 = vmatpush1.bf16.xpose.msra.mxu0 %v461
        %465 = vmatprep.subr.bf16.mxu0 0
        %466 = vmatpush1.bf16.xpose.msra.mxu0 0
        %467 = vmatprep.subr.bf16.mxu0 0
        %468 = vmatpush1.bf16.xpose.msra.mxu0 0
        %469 = vmatprep.subr.bf16.mxu0 0
        %470 = vmatpush1.bf16.xpose.msra.mxu0 0
        %471 = vmatprep.subr.bf16.mxu0 0
        %472 = vmatpush1.bf16.xpose.msra.mxu0 0
        %473 = vmatprep.subr.bf16.mxu0 0
        %474 = vmatpush1.bf16.xpose.msra.mxu0 0
        %475 = vmatprep.subr.bf16.mxu0 0
        %476 = vmatpush1.bf16.xpose.msra.mxu0 0
        %477 = vmatprep.subr.bf16.mxu0 0
        %478 = vmatpush1.bf16.xpose.msra.mxu0 0
        %479 = vmatprep.subr.bf16.mxu0 0
        %480 = vmatpush1.bf16.xpose.msra.mxu0 0
        %481 = vmatprep.subr.bf16.mxu0 0
        %482 = vmatpush1.bf16.xpose.msra.mxu0 0
        %483 = vmatprep.subr.bf16.mxu0 0
        %484 = vmatpush1.bf16.xpose.msra.mxu0 0
        %485 = vmatprep.subr.bf16.mxu0 0
        %486 = vmatpush1.bf16.xpose.msra.mxu0 0
        %487 = vmatprep.subr.bf16.mxu0 0
        %488 = vmatpush1.bf16.xpose.msra.mxu0 0
        %489 = vmatprep.subr.bf16.mxu0 0
        %490 = vmatpush1.bf16.xpose.msra.mxu0 0
        %491 = vmatprep.subr.bf16.mxu0 0
        %492 = vmatpush1.bf16.xpose.msra.mxu0 0
        %493 = vmatprep.subr.bf16.mxu0 0
        %494 = vmatpush1.bf16.xpose.msra.mxu0 0
        %495 = vmatprep.mubr.bf16.mxu0 0
        %496 = vmatmul.mubr.bf16.gmra.mrb[0].mxu0 %v458
        %v497 = vpop.f32.mrb[0].mxu0
        %v498 = vadd.f32 0.0, %v497
        %v499 = vpop.f32.mrb[0].mxu0
        %v500 = vpop.f32.mrb[0].mxu0
        %v501 = vpop.f32.mrb[0].mxu0
        %502 = vdwg.mxu0
        %v503 = vsel %vm333, %v498, -1e+30
        %v504 = vsel %vm340, %v503, -inf
        %505 = vmax.xlane.f32.xlu0 %v504
        %v506 = vpop.xlane.xlu0 %505
        %v507 = vsub.f32 %v503, %v506
        %v508 = vmul.f32 %v507, 1.442695
        %v509 = vpow.pop %v508
        %v510 = vsel %vm340, %v509, 0.0
        %511 = vadd.xlane.f32.xlu0 %v510
        %v512 = vpop.xlane.xlu0 %511
        %v513 = vrcp.pop %v512
        %v514 = vmul.f32 %v509, %v513
        %v515 = vpack.c.bf16 %v514, %v514
        %516 = vrot.lane.b32.xlu0 %v336, 56
        %v517 = vpop.permute.xlu0 %516
        %v519 = vsel %vm340, %v515, 0
        %v522 = vsel %vm405, %v517, 0
        %524 = vmatprep.subr.bf16.mxu0 0
        %525 = vmatpush1.bf16.msra.mxu0 %v522
        %526 = vmatprep.subr.bf16.mxu0 0
        %527 = vmatpush1.bf16.msra.mxu0 0
        %528 = vmatprep.subr.bf16.mxu0 0
        %529 = vmatpush1.bf16.msra.mxu0 0
        %530 = vmatprep.subr.bf16.mxu0 0
        %531 = vmatpush1.bf16.msra.mxu0 0
        %532 = vmatprep.subr.bf16.mxu0 0
        %533 = vmatpush1.bf16.msra.mxu0 0
        %534 = vmatprep.subr.bf16.mxu0 0
        %535 = vmatpush1.bf16.msra.mxu0 0
        %536 = vmatprep.subr.bf16.mxu0 0
        %537 = vmatpush1.bf16.msra.mxu0 0
        %538 = vmatprep.subr.bf16.mxu0 0
        %539 = vmatpush1.bf16.msra.mxu0 0
        %540 = vmatprep.subr.bf16.mxu0 0
        %541 = vmatpush1.bf16.msra.mxu0 0
        %542 = vmatprep.subr.bf16.mxu0 0
        %543 = vmatpush1.bf16.msra.mxu0 0
        %544 = vmatprep.subr.bf16.mxu0 0
        %545 = vmatpush1.bf16.msra.mxu0 0
        %546 = vmatprep.subr.bf16.mxu0 0
        %547 = vmatpush1.bf16.msra.mxu0 0
        %548 = vmatprep.subr.bf16.mxu0 0
        %549 = vmatpush1.bf16.msra.mxu0 0
        %550 = vmatprep.subr.bf16.mxu0 0
        %551 = vmatpush1.bf16.msra.mxu0 0
        %552 = vmatprep.subr.bf16.mxu0 0
        %553 = vmatpush1.bf16.msra.mxu0 0
        %554 = vmatprep.subr.bf16.mxu0 0
        %555 = vmatpush1.bf16.msra.mxu0 0
        %556 = vmatprep.mubr.bf16.mxu0 0
        %557 = vmatmul.mubr.bf16.gmra.mrb[0].mxu0 %v519
        %v558 = vpop.f32.mrb[0].mxu0
        %v559 = vadd.f32 0.0, %v558
        %v560 = vpop.f32.mrb[0].mxu0
        %v561 = vpop.f32.mrb[0].mxu0
        %v562 = vpop.f32.mrb[0].mxu0
        %563 = vdwg.mxu0
        %v564 = vld [vmem:[#allocation7 + $0x8] sm:$0xff]
        %v565 = vpack.c.bf16 %v564, %v564
        %v566 = vpack.c.bf16 %v559, %v559
        %v568 = vsel %vm340, %v566, 0
        %v571 = vsel %vm405, %v565, 0
        %573 = vmatprep.subr.bf16.mxu0 0
        %574 = vmatpush1.bf16.msra.mxu0 %v571
        %575 = vmatprep.subr.bf16.mxu0 0
        %576 = vmatpush1.bf16.msra.mxu0 0
        %577 = vmatprep.subr.bf16.mxu0 0
        %578 = vmatpush1.bf16.msra.mxu0 0
        %579 = vmatprep.subr.bf16.mxu0 0
        %580 = vmatpush1.bf16.msra.mxu0 0
        %581 = vmatprep.subr.bf16.mxu0 0
        %582 = vmatpush1.bf16.msra.mxu0 0
        %583 = vmatprep.subr.bf16.mxu0 0
        %584 = vmatpush1.bf16.msra.mxu0 0
        %585 = vmatprep.subr.bf16.mxu0 0
        %586 = vmatpush1.bf16.msra.mxu0 0
        %587 = vmatprep.subr.bf16.mxu0 0
        %588 = vmatpush1.bf16.msra.mxu0 0
        %589 = vmatprep.subr.bf16.mxu0 0
        %590 = vmatpush1.bf16.msra.mxu0 0
        %591 = vmatprep.subr.bf16.mxu0 0
        %592 = vmatpush1.bf16.msra.mxu0 0
        %593 = vmatprep.subr.bf16.mxu0 0
        %594 = vmatpush1.bf16.msra.mxu0 0
        %595 = vmatprep.subr.bf16.mxu0 0
        %596 = vmatpush1.bf16.msra.mxu0 0
        %597 = vmatprep.subr.bf16.mxu0 0
        %598 = vmatpush1.bf16.msra.mxu0 0
        %599 = vmatprep.subr.bf16.mxu0 0
        %600 = vmatpush1.bf16.msra.mxu0 0
        %601 = vmatprep.subr.bf16.mxu0 0
        %602 = vmatpush1.bf16.msra.mxu0 0
        %603 = vmatprep.subr.bf16.mxu0 0
        %604 = vmatpush1.bf16.msra.mxu0 0
        %605 = vmatprep.mubr.bf16.mxu0 0
        %606 = vmatmul.mubr.bf16.gmra.mrb[0].mxu0 %v568
        %v607 = vpop.f32.mrb[0].mxu0
        %v608 = vadd.f32 0.0, %v607
        %v609 = vpop.f32.mrb[0].mxu0
        %v610 = vpop.f32.mrb[0].mxu0
        %v611 = vpop.f32.mrb[0].mxu0
        %612 = vdwg.mxu0
        %v614 = vsel %vm340, %v451, 0
        %v617 = vsel %vm405, %v450, 0
        %619 = vmatprep.subr.bf16.mxu0 0
        %620 = vmatpush1.bf16.msra.mxu0 %v617
        %621 = vmatprep.subr.bf16.mxu0 0
        %622 = vmatpush1.bf16.msra.mxu0 0
        %623 = vmatprep.subr.bf16.mxu0 0
        %624 = vmatpush1.bf16.msra.mxu0 0
        %625 = vmatprep.subr.bf16.mxu0 0
        %626 = vmatpush1.bf16.msra.mxu0 0
        %627 = vmatprep.subr.bf16.mxu0 0
        %628 = vmatpush1.bf16.msra.mxu0 0
        %629 = vmatprep.subr.bf16.mxu0 0
        %630 = vmatpush1.bf16.msra.mxu0 0
        %631 = vmatprep.subr.bf16.mxu0 0
        %632 = vmatpush1.bf16.msra.mxu0 0
        %633 = vmatprep.subr.bf16.mxu0 0
        %634 = vmatpush1.bf16.msra.mxu0 0
        %635 = vmatprep.subr.bf16.mxu0 0
        %636 = vmatpush1.bf16.msra.mxu0 0
        %637 = vmatprep.subr.bf16.mxu0 0
        %638 = vmatpush1.bf16.msra.mxu0 0
        %639 = vmatprep.subr.bf16.mxu0 0
        %640 = vmatpush1.bf16.msra.mxu0 0
        %641 = vmatprep.subr.bf16.mxu0 0
        %642 = vmatpush1.bf16.msra.mxu0 0
        %643 = vmatprep.subr.bf16.mxu0 0
        %644 = vmatpush1.bf16.msra.mxu0 0
        %645 = vmatprep.subr.bf16.mxu0 0
        %646 = vmatpush1.bf16.msra.mxu0 0
        %647 = vmatprep.subr.bf16.mxu0 0
        %648 = vmatpush1.bf16.msra.mxu0 0
        %649 = vmatprep.subr.bf16.mxu0 0
        %650 = vmatpush1.bf16.msra.mxu0 0
        %651 = vmatprep.mubr.bf16.mxu0 0
        %652 = vmatmul.mubr.bf16.gmra.mrb[0].mxu0 %v614
        %v653 = vpop.f32.mrb[0].mxu0
        %v654 = vadd.f32 %v608, %v653
        %v655 = vpop.f32.mrb[0].mxu0
        %v656 = vpop.f32.mrb[0].mxu0
        %v657 = vpop.f32.mrb[0].mxu0
        %658 = vdwg.mxu0
        %659 = vrot.lane.b32.xlu0 %v335, 112
        %v660 = vpop.permute.xlu0 %659
        %661 = vrot.lane.b32.xlu0 %v336, 80
        %v662 = vpop.permute.xlu0 %661
        %v664 = vsel %vm340, %v660, 0
        %v667 = vsel %vm340, %v662, 0
        %669 = vmatprep.subr.bf16.mxu0 0
        %670 = vmatpush1.bf16.xpose.msra.mxu0 %v667
        %671 = vmatprep.subr.bf16.mxu0 0
        %672 = vmatpush1.bf16.xpose.msra.mxu0 0
        %673 = vmatprep.subr.bf16.mxu0 0
        %674 = vmatpush1.bf16.xpose.msra.mxu0 0
        %675 = vmatprep.subr.bf16.mxu0 0
        %676 = vmatpush1.bf16.xpose.msra.mxu0 0
        %677 = vmatprep.subr.bf16.mxu0 0
        %678 = vmatpush1.bf16.xpose.msra.mxu0 0
        %679 = vmatprep.subr.bf16.mxu0 0
        %680 = vmatpush1.bf16.xpose.msra.mxu0 0
        %681 = vmatprep.subr.bf16.mxu0 0
        %682 = vmatpush1.bf16.xpose.msra.mxu0 0
        %683 = vmatprep.subr.bf16.mxu0 0
        %684 = vmatpush1.bf16.xpose.msra.mxu0 0
        %685 = vmatprep.subr.bf16.mxu0 0
        %686 = vmatpush1.bf16.xpose.msra.mxu0 0
        %687 = vmatprep.subr.bf16.mxu0 0
        %688 = vmatpush1.bf16.xpose.msra.mxu0 0
        %689 = vmatprep.subr.bf16.mxu0 0
        %690 = vmatpush1.bf16.xpose.msra.mxu0 0
        %691 = vmatprep.subr.bf16.mxu0 0
        %692 = vmatpush1.bf16.xpose.msra.mxu0 0
        %693 = vmatprep.subr.bf16.mxu0 0
        %694 = vmatpush1.bf16.xpose.msra.mxu0 0
        %695 = vmatprep.subr.bf16.mxu0 0
        %696 = vmatpush1.bf16.xpose.msra.mxu0 0
        %697 = vmatprep.subr.bf16.mxu0 0
        %698 = vmatpush1.bf16.xpose.msra.mxu0 0
        %699 = vmatprep.subr.bf16.mxu0 0
        %700 = vmatpush1.bf16.xpose.msra.mxu0 0
        %701 = vmatprep.mubr.bf16.mxu0 0
        %702 = vmatmul.mubr.bf16.gmra.mrb[0].mxu0 %v664
        %v703 = vpop.f32.mrb[0].mxu0
        %v704 = vadd.f32 0.0, %v703
        %v705 = vpop.f32.mrb[0].mxu0
        %v706 = vpop.f32.mrb[0].mxu0
        %v707 = vpop.f32.mrb[0].mxu0
        %708 = vdwg.mxu0
        %v709 = vsel %vm333, %v704, -1e+30
        %v710 = vsel %vm340, %v709, -inf
        %711 = vmax.xlane.f32.xlu0 %v710
        %v712 = vpop.xlane.xlu0 %711
        %v713 = vsub.f32 %v709, %v712
        %v714 = vmul.f32 %v713, 1.442695
        %v715 = vpow.pop %v714
        %v716 = vsel %vm340, %v715, 0.0
        %717 = vadd.xlane.f32.xlu0 %v716
        %v718 = vpop.xlane.xlu0 %717
        %v719 = vrcp.pop %v718
        %v720 = vmul.f32 %v715, %v719
        %v721 = vpack.c.bf16 %v720, %v720
        %722 = vrot.lane.b32.xlu0 %v336, 48
        %v723 = vpop.permute.xlu0 %722
        %v725 = vsel %vm340, %v721, 0
        %v728 = vsel %vm405, %v723, 0
        %730 = vmatprep.subr.bf16.mxu0 0
        %731 = vmatpush1.bf16.msra.mxu0 %v728
        %732 = vmatprep.subr.bf16.mxu0 0
        %733 = vmatpush1.bf16.msra.mxu0 0
        %734 = vmatprep.subr.bf16.mxu0 0
        %735 = vmatpush1.bf16.msra.mxu0 0
        %736 = vmatprep.subr.bf16.mxu0 0
        %737 = vmatpush1.bf16.msra.mxu0 0
        %738 = vmatprep.subr.bf16.mxu0 0
        %739 = vmatpush1.bf16.msra.mxu0 0
        %740 = vmatprep.subr.bf16.mxu0 0
        %741 = vmatpush1.bf16.msra.mxu0 0
        %742 = vmatprep.subr.bf16.mxu0 0
        %743 = vmatpush1.bf16.msra.mxu0 0
        %744 = vmatprep.subr.bf16.mxu0 0
        %745 = vmatpush1.bf16.msra.mxu0 0
        %746 = vmatprep.subr.bf16.mxu0 0
        %747 = vmatpush1.bf16.msra.mxu0 0
        %748 = vmatprep.subr.bf16.mxu0 0
        %749 = vmatpush1.bf16.msra.mxu0 0
        %750 = vmatprep.subr.bf16.mxu0 0
        %751 = vmatpush1.bf16.msra.mxu0 0
        %752 = vmatprep.subr.bf16.mxu0 0
        %753 = vmatpush1.bf16.msra.mxu0 0
        %754 = vmatprep.subr.bf16.mxu0 0
        %755 = vmatpush1.bf16.msra.mxu0 0
        %756 = vmatprep.subr.bf16.mxu0 0
        %757 = vmatpush1.bf16.msra.mxu0 0
        %758 = vmatprep.subr.bf16.mxu0 0
        %759 = vmatpush1.bf16.msra.mxu0 0
        %760 = vmatprep.subr.bf16.mxu0 0
        %761 = vmatpush1.bf16.msra.mxu0 0
        %762 = vmatprep.mubr.bf16.mxu0 0
        %763 = vmatmul.mubr.bf16.gmra.mrb[0].mxu0 %v725
        %v764 = vpop.f32.mrb[0].mxu0
        %v765 = vadd.f32 0.0, %v764
        %v766 = vpop.f32.mrb[0].mxu0
        %v767 = vpop.f32.mrb[0].mxu0
        %v768 = vpop.f32.mrb[0].mxu0
        %769 = vdwg.mxu0
        %v770 = vld [vmem:[#allocation7 + $0x10] sm:$0xff]
        %v771 = vpack.c.bf16 %v770, %v770
        %v772 = vpack.c.bf16 %v765, %v765
        %v774 = vsel %vm340, %v772, 0
        %v777 = vsel %vm405, %v771, 0
        %779 = vmatprep.subr.bf16.mxu0 0
        %780 = vmatpush1.bf16.msra.mxu0 %v777
        %781 = vmatprep.subr.bf16.mxu0 0
        %782 = vmatpush1.bf16.msra.mxu0 0
        %783 = vmatprep.subr.bf16.mxu0 0
        %784 = vmatpush1.bf16.msra.mxu0 0
        %785 = vmatprep.subr.bf16.mxu0 0
        %786 = vmatpush1.bf16.msra.mxu0 0
        %787 = vmatprep.subr.bf16.mxu0 0
        %788 = vmatpush1.bf16.msra.mxu0 0
        %789 = vmatprep.subr.bf16.mxu0 0
        %790 = vmatpush1.bf16.msra.mxu0 0
        %791 = vmatprep.subr.bf16.mxu0 0
        %792 = vmatpush1.bf16.msra.mxu0 0
        %793 = vmatprep.subr.bf16.mxu0 0
        %794 = vmatpush1.bf16.msra.mxu0 0
        %795 = vmatprep.subr.bf16.mxu0 0
        %796 = vmatpush1.bf16.msra.mxu0 0
        %797 = vmatprep.subr.bf16.mxu0 0
        %798 = vmatpush1.bf16.msra.mxu0 0
        %799 = vmatprep.subr.bf16.mxu0 0
        %800 = vmatpush1.bf16.msra.mxu0 0
        %801 = vmatprep.subr.bf16.mxu0 0
        %802 = vmatpush1.bf16.msra.mxu0 0
        %803 = vmatprep.subr.bf16.mxu0 0
        %804 = vmatpush1.bf16.msra.mxu0 0
        %805 = vmatprep.subr.bf16.mxu0 0
        %806 = vmatpush1.bf16.msra.mxu0 0
        %807 = vmatprep.subr.bf16.mxu0 0
        %808 = vmatpush1.bf16.msra.mxu0 0
        %809 = vmatprep.subr.bf16.mxu0 0
        %810 = vmatpush1.bf16.msra.mxu0 0
        %811 = vmatprep.mubr.bf16.mxu0 0
        %812 = vmatmul.mubr.bf16.gmra.mrb[0].mxu0 %v774
        %v813 = vpop.f32.mrb[0].mxu0
        %v814 = vadd.f32 0.0, %v813
        %v815 = vpop.f32.mrb[0].mxu0
        %v816 = vpop.f32.mrb[0].mxu0
        %v817 = vpop.f32.mrb[0].mxu0
        %818 = vdwg.mxu0
        %v819 = vadd.f32 %v654, %v814
        %820 = vrot.lane.b32.xlu0 %v335, 104
        %v821 = vpop.permute.xlu0 %820
        %822 = vrot.lane.b32.xlu0 %v336, 72
        %v823 = vpop.permute.xlu0 %822
        %v825 = vsel %vm340, %v821, 0
        %v828 = vsel %vm340, %v823, 0
        %830 = vmatprep.subr.bf16.mxu0 0
        %831 = vmatpush1.bf16.xpose.msra.mxu0 %v828
        %832 = vmatprep.subr.bf16.mxu0 0
        %833 = vmatpush1.bf16.xpose.msra.mxu0 0
        %834 = vmatprep.subr.bf16.mxu0 0
        %835 = vmatpush1.bf16.xpose.msra.mxu0 0
        %836 = vmatprep.subr.bf16.mxu0 0
        %837 = vmatpush1.bf16.xpose.msra.mxu0 0
        %838 = vmatprep.subr.bf16.mxu0 0
        %839 = vmatpush1.bf16.xpose.msra.mxu0 0
        %840 = vmatprep.subr.bf16.mxu0 0
        %841 = vmatpush1.bf16.xpose.msra.mxu0 0
        %842 = vmatprep.subr.bf16.mxu0 0
        %843 = vmatpush1.bf16.xpose.msra.mxu0 0
        %844 = vmatprep.subr.bf16.mxu0 0
        %845 = vmatpush1.bf16.xpose.msra.mxu0 0
        %846 = vmatprep.subr.bf16.mxu0 0
        %847 = vmatpush1.bf16.xpose.msra.mxu0 0
        %848 = vmatprep.subr.bf16.mxu0 0
        %849 = vmatpush1.bf16.xpose.msra.mxu0 0
        %850 = vmatprep.subr.bf16.mxu0 0
        %851 = vmatpush1.bf16.xpose.msra.mxu0 0
        %852 = vmatprep.subr.bf16.mxu0 0
        %853 = vmatpush1.bf16.xpose.msra.mxu0 0
        %854 = vmatprep.subr.bf16.mxu0 0
        %855 = vmatpush1.bf16.xpose.msra.mxu0 0
        %856 = vmatprep.subr.bf16.mxu0 0
        %857 = vmatpush1.bf16.xpose.msra.mxu0 0
        %858 = vmatprep.subr.bf16.mxu0 0
        %859 = vmatpush1.bf16.xpose.msra.mxu0 0
        %860 = vmatprep.subr.bf16.mxu0 0
        %861 = vmatpush1.bf16.xpose.msra.mxu0 0
        %862 = vmatprep.mubr.bf16.mxu0 0
        %863 = vmatmul.mubr.bf16.gmra.mrb[0].mxu0 %v825
        %v864 = vpop.f32.mrb[0].mxu0
        %v865 = vadd.f32 0.0, %v864
        %v866 = vpop.f32.mrb[0].mxu0
        %v867 = vpop.f32.mrb[0].mxu0
        %v868 = vpop.f32.mrb[0].mxu0
        %869 = vdwg.mxu0
        %v870 = vsel %vm333, %v865, -1e+30
        %v871 = vsel %vm340, %v870, -inf
        %872 = vmax.xlane.f32.xlu0 %v871
        %v873 = vpop.xlane.xlu0 %872
        %v874 = vsub.f32 %v870, %v873
        %v875 = vmul.f32 %v874, 1.442695
        %v876 = vpow.pop %v875
        %v877 = vsel %vm340, %v876, 0.0
        %878 = vadd.xlane.f32.xlu0 %v877
        %v879 = vpop.xlane.xlu0 %878
        %v880 = vrcp.pop %v879
        %v881 = vmul.f32 %v876, %v880
        %v882 = vpack.c.bf16 %v881, %v881
        %883 = vrot.lane.b32.xlu0 %v336, 40
        %v884 = vpop.permute.xlu0 %883
        %v886 = vsel %vm340, %v882, 0
        %v889 = vsel %vm405, %v884, 0
        %891 = vmatprep.subr.bf16.mxu0 0
        %892 = vmatpush1.bf16.msra.mxu0 %v889
        %893 = vmatprep.subr.bf16.mxu0 0
        %894 = vmatpush1.bf16.msra.mxu0 0
        %895 = vmatprep.subr.bf16.mxu0 0
        %896 = vmatpush1.bf16.msra.mxu0 0
        %897 = vmatprep.subr.bf16.mxu0 0
        %898 = vmatpush1.bf16.msra.mxu0 0
        %899 = vmatprep.subr.bf16.mxu0 0
        %900 = vmatpush1.bf16.msra.mxu0 0
        %901 = vmatprep.subr.bf16.mxu0 0
        %902 = vmatpush1.bf16.msra.mxu0 0
        %903 = vmatprep.subr.bf16.mxu0 0
        %904 = vmatpush1.bf16.msra.mxu0 0
        %905 = vmatprep.subr.bf16.mxu0 0
        %906 = vmatpush1.bf16.msra.mxu0 0
        %907 = vmatprep.subr.bf16.mxu0 0
        %908 = vmatpush1.bf16.msra.mxu0 0
        %909 = vmatprep.subr.bf16.mxu0 0
        %910 = vmatpush1.bf16.msra.mxu0 0
        %911 = vmatprep.subr.bf16.mxu0 0
        %912 = vmatpush1.bf16.msra.mxu0 0
        %913 = vmatprep.subr.bf16.mxu0 0
        %914 = vmatpush1.bf16.msra.mxu0 0
        %915 = vmatprep.subr.bf16.mxu0 0
        %916 = vmatpush1.bf16.msra.mxu0 0
        %917 = vmatprep.subr.bf16.mxu0 0
        %918 = vmatpush1.bf16.msra.mxu0 0
        %919 = vmatprep.subr.bf16.mxu0 0
        %920 = vmatpush1.bf16.msra.mxu0 0
        %921 = vmatprep.subr.bf16.mxu0 0
        %922 = vmatpush1.bf16.msra.mxu0 0
        %923 = vmatprep.mubr.bf16.mxu0 0
        %924 = vmatmul.mubr.bf16.gmra.mrb[0].mxu0 %v886
        %v925 = vpop.f32.mrb[0].mxu0
        %v926 = vadd.f32 0.0, %v925
        %v927 = vpop.f32.mrb[0].mxu0
        %v928 = vpop.f32.mrb[0].mxu0
        %v929 = vpop.f32.mrb[0].mxu0
        %930 = vdwg.mxu0
        %v931 = vld [vmem:[#allocation7 + $0x18] sm:$0xff]
        %v932 = vpack.c.bf16 %v931, %v931
        %v933 = vpack.c.bf16 %v926, %v926
        %v935 = vsel %vm340, %v933, 0
        %v938 = vsel %vm405, %v932, 0
        %940 = vmatprep.subr.bf16.mxu0 0
        %941 = vmatpush1.bf16.msra.mxu0 %v938
        %942 = vmatprep.subr.bf16.mxu0 0
        %943 = vmatpush1.bf16.msra.mxu0 0
        %944 = vmatprep.subr.bf16.mxu0 0
        %945 = vmatpush1.bf16.msra.mxu0 0
        %946 = vmatprep.subr.bf16.mxu0 0
        %947 = vmatpush1.bf16.msra.mxu0 0
        %948 = vmatprep.subr.bf16.mxu0 0
        %949 = vmatpush1.bf16.msra.mxu0 0
        %950 = vmatprep.subr.bf16.mxu0 0
        %951 = vmatpush1.bf16.msra.mxu0 0
        %952 = vmatprep.subr.bf16.mxu0 0
        %953 = vmatpush1.bf16.msra.mxu0 0
        %954 = vmatprep.subr.bf16.mxu0 0
        %955 = vmatpush1.bf16.msra.mxu0 0
        %956 = vmatprep.subr.bf16.mxu0 0
        %957 = vmatpush1.bf16.msra.mxu0 0
        %958 = vmatprep.subr.bf16.mxu0 0
        %959 = vmatpush1.bf16.msra.mxu0 0
        %960 = vmatprep.subr.bf16.mxu0 0
        %961 = vmatpush1.bf16.msra.mxu0 0
        %962 = vmatprep.subr.bf16.mxu0 0
        %963 = vmatpush1.bf16.msra.mxu0 0
        %964 = vmatprep.subr.bf16.mxu0 0
        %965 = vmatpush1.bf16.msra.mxu0 0
        %966 = vmatprep.subr.bf16.mxu0 0
        %967 = vmatpush1.bf16.msra.mxu0 0
        %968 = vmatprep.subr.bf16.mxu0 0
        %969 = vmatpush1.bf16.msra.mxu0 0
        %970 = vmatprep.subr.bf16.mxu0 0
        %971 = vmatpush1.bf16.msra.mxu0 0
        %972 = vmatprep.mubr.bf16.mxu0 0
        %973 = vmatmul.mubr.bf16.gmra.mrb[0].mxu0 %v935
        %v974 = vpop.f32.mrb[0].mxu0
        %v975 = vadd.f32 0.0, %v974
        %v976 = vpop.f32.mrb[0].mxu0
        %v977 = vpop.f32.mrb[0].mxu0
        %v978 = vpop.f32.mrb[0].mxu0
        %979 = vdwg.mxu0
        %v980 = vadd.f32 %v819, %v975
        %v981 = vld [vmem:[%s4] sm:$0x1]
        %v983 = vlaneseq
        %v984 = vshrl.u32 %v983, 7
        %v985 = vsub.s32 0, %v984
        %v986 = vrot.slane %v981, %v985
        %v988 = vadd.f32 %v980, %v986
        %989 = vst.msk [vmem:[%s268] sm:$0xff] %vm285, %v988
        %s990 = sand.u32 %s141, 1
        %s991 = scalar_lea.sflag [#allocation4], %s990
        %s992 = sand.u32 %s141, 1
        %s993 = smul.addr %s992, 8
        %s994 = scalar_lea.vmem [#allocation8], %s993
        // Predicated region
        $region53: #{causal_self_attention.1} parent=39 // pred_check
          %p995 = pneg %p151
        $region54: #{causal_self_attention.1} parent=39 // pred_check_branch
          %997 = sbr.rel (%p995) target = $region56
        $region55: #{causal_self_attention.1} parent=39 // pred_region
          %s999 = ssub.s32 128, 128
          %1000 = vsyncadd %s991, %s999
          %s1001 = smul.addr %s23, 128
          %s1002 = scalar_lea.hbm %s5, %s1001
          %s1004 = sshll.u32 %s994, 4
          %s1005 = int_to_ptr.vmem [resolvable:$true] %s1004
          %1007 = dma.vmem_to_hbm [thread:$0]  %s1005, 128, %s1002, %s991
        $region56: #{causal_self_attention.1} parent=39 // pred_fallthru
          _
      $region40: #{causal_self_attention.1} parent=5 // pred_fallthru
        _
      %p1008 = scmp.le.s32.totalorder 2, %s18
      // Predicated region
      $region57: #{causal_self_attention.1} parent=5 // pred_check
        %p1009 = pneg %p1008
      $region58: #{causal_self_attention.1} parent=5 // pred_check_branch
        %1011 = sbr.rel (%p1009) target = $region60
      $region59: #{causal_self_attention.1} parent=5 // pred_region
        %s1012 = ssub.s32 %s18, 2
        // Predicated region
        $region61: #{causal_self_attention.1} parent=59 // pred_check
          %p1013 = pneg %p157
        $region62: #{causal_self_attention.1} parent=59 // pred_check_branch
          %1015 = sbr.rel (%p1013) target = $region64
        $region63: #{causal_self_attention.1} parent=59 // pred_region
          %s1016 = sand.u32 %s142, 1
          %s1017 = scalar_lea.sflag [#allocation4], %s1016
          %s1018 = sand.u32 %s142, 1
          %s1019 = smul.addr %s1018, 8
          %s1020 = scalar_lea.vmem [#allocation8], %s1019
          %1021 = dma.done %s1017, 128
        $region64: #{causal_self_attention.1} parent=59 // pred_fallthru
          _
      $region60: #{causal_self_attention.1} parent=5 // pred_fallthru
        _
    $region6: #{causal_self_attention.1} parent=1 // loop_footer
      %s22 = sadd.s32 1, %s18
    $region7: #{causal_self_attention.1} parent=1 // loop_footer_branch
      %17 = sbr.rel target = $region3
    $region8: #{causal_self_attention.1} parent=1 // loop_exit
      _
    %1022 = vsyncpa [#allocation3], 1
    %s1023 = scalar_lea.sflag [#allocation3], 1
    %1024 = vsyncpa %s1023, 1
    %1025 = vsyncpa [#allocation6], 1
    %1026 = vsyncpa [#allocation4], 1
    %s1027 = scalar_lea.sflag [#allocation4], 1
    %1028 = vsyncpa %s1027, 1

</llo_original>
